<compile_context>
chip_gen: v6e
topology: v6e:2x2x1
jax: 0.10.0
libtpu: 0.0.40
codegen_flags: <defaults>
</compile_context>

<pallas_src>
import functools

import jax
import jax.numpy as jnp
from jax import lax
from jax.experimental import pallas as pl
from jax.experimental.pallas import tpu as pltpu


MAX_NORM = 1.0
RENORM_EPS = 1e-7  # matches torch.embedding_renorm_ (reference only)


# ---------------------------------------------------------------------------
# Fast path: table resident in VMEM, one-hot MXU gather.
# ---------------------------------------------------------------------------
def _onehot_gather_kernel(idx_ref, table_ref, subj_ref, obj_ref, *, bt, n_ents, vocab):
    """One grid step = one batch block of `bt` rows.

    idx_ref   : VMEM (bt*N, 1) int32  block indices, ordered [subjects|objects]
    table_ref : VMEM (V, D)           full embedding table (resident, const block)
    subj_ref  : VMEM (bt, D)          subject rows (written once, broadcast outside)
    obj_ref   : VMEM (bt*(N-1), D)    object rows
    """
    rows = bt * n_ents
    idx = idx_ref[...]                                        # (rows, 1) int32
    iota = lax.broadcasted_iota(jnp.int32, (rows, vocab), 1)  # (rows, V)
    onehot = (iota == idx).astype(table_ref.dtype)            # (rows, V)

    # In-VMEM gather on the otherwise idle MXU.
    g = jnp.dot(onehot, table_ref[...],
                preferred_element_type=jnp.float32)           # (rows, D) f32

    # nn.Embedding(max_norm=1.0): rescale rows whose L2 norm exceeds 1.
    sumsq = jnp.sum(g * g, axis=-1, keepdims=True)            # (rows, 1)
    scale = jnp.where(sumsq > MAX_NORM * MAX_NORM,
                      MAX_NORM * lax.rsqrt(sumsq),            # EUP slot
                      jnp.ones_like(sumsq))
    g = g * scale

    subj_ref[...] = g[:bt, :].astype(subj_ref.dtype)
    obj_ref[...] = g[bt:, :].astype(obj_ref.dtype)


def _forward_fast(flat_idx_2d, table, *, num_blocks, bt, n_ents, vmem_limit):
    V, D = table.shape
    rows = bt * n_ents
    b_pad = num_blocks * bt
    kernel = functools.partial(_onehot_gather_kernel, bt=bt, n_ents=n_ents, vocab=V)

    grid_spec = pltpu.PrefetchScalarGridSpec(
        num_scalar_prefetch=0,
        grid=(num_blocks,),
        in_specs=[
            pl.BlockSpec((rows, 1), lambda blk: (blk, 0)),   # block's indices
            pl.BlockSpec((V, D), lambda blk: (0, 0)),        # whole table, VMEM-resident
        ],
        out_specs=[
            pl.BlockSpec((bt, D), lambda blk: (blk, 0)),
            pl.BlockSpec((bt * (n_ents - 1), D), lambda blk: (blk, 0)),
        ],
    )
    out_shape = (
        jax.ShapeDtypeStruct((b_pad, D), table.dtype),
        jax.ShapeDtypeStruct((b_pad * (n_ents - 1), D), table.dtype),
    )
    return pl.pallas_call(
        kernel,
        out_shape=out_shape,
        grid_spec=grid_spec,
        compiler_params=pltpu.CompilerParams(
            dimension_semantics=("parallel",),   # blocks independent -> both v7x TCs
            vmem_limit_bytes=vmem_limit,
        ),
    )(flat_idx_2d, table)


# ---------------------------------------------------------------------------
# Fallback path: table in HBM, per-row gather DMAs double-buffered across steps.
# ---------------------------------------------------------------------------
def _dma_gather_kernel(idx_ref, table_hbm, subj_ref, obj_ref, gbuf, sems, *,
                       bt, n_ents):
    """idx_ref : SMEM (b_pad*N,) int32  flat indices (scalar prefetch)
    table_hbm : HBM  (V, D)             full table, never copied wholesale
    gbuf      : VMEM (2, bt*N, D)       double-buffered gather scratch
    sems      : DMA semaphores (2,)     one shared semaphore per buffer slot
    """
    rows = bt * n_ents
    nblk = pl.num_programs(0)
    blk = pl.program_id(0)
    slot = blk & 1

    def issue(blk_i, slot_i):
        base = blk_i * rows

        @pl.loop(0, rows)
        def _(r):
            row = idx_ref[base + r]
            pltpu.make_async_copy(
                table_hbm.at[pl.ds(row, 1), :],
                gbuf.at[slot_i, pl.ds(r, 1), :],
                sems.at[slot_i],
            ).start()

    # Prologue: prime slot 0 with the first block's rows.
    @pl.when(blk == 0)
    def _():
        issue(0, 0)

    # Prefetch next block's rows into the other slot (hidden behind compute).
    @pl.when(blk + 1 < nblk)
    def _():
        issue(blk + 1, 1 - slot)

    # Wait for this block's gathers.  Descriptors are rebuilt from the SAME
    # SMEM indices, so src/dst/semaphore match the started copies exactly.
    base = blk * rows

    @pl.loop(0, rows)
    def _(r):
        row = idx_ref[base + r]
        pltpu.make_async_copy(
            table_hbm.at[pl.ds(row, 1), :],
            gbuf.at[slot, pl.ds(r, 1), :],
            sems.at[slot],
        ).wait()

    g = gbuf[slot].astype(jnp.float32)                        # (rows, D)
    sumsq = jnp.sum(g * g, axis=-1, keepdims=True)
    scale = jnp.where(sumsq > MAX_NORM * MAX_NORM,
                      MAX_NORM * lax.rsqrt(sumsq),
                      jnp.ones_like(sumsq))
    g = g * scale

    subj_ref[...] = g[:bt, :].astype(subj_ref.dtype)
    obj_ref[...] = g[bt:, :].astype(obj_ref.dtype)


def _forward_dma(flat_idx_1d, table, *, num_blocks, bt, n_ents, vmem_limit):
    V, D = table.shape
    rows = bt * n_ents
    b_pad = num_blocks * bt
    kernel = functools.partial(_dma_gather_kernel, bt=bt, n_ents=n_ents)

    grid_spec = pltpu.PrefetchScalarGridSpec(
        num_scalar_prefetch=1,                   # flat indices -> SMEM
        grid=(num_blocks,),
        in_specs=[pl.BlockSpec(memory_space=pl.ANY)],   # table stays in HBM
        out_specs=[
            pl.BlockSpec((bt, D), lambda blk, idx_r: (blk, 0)),
            pl.BlockSpec((bt * (n_ents - 1), D), lambda blk, idx_r: (blk, 0)),
        ],
        scratch_shapes=[
            pltpu.VMEM((2, rows, D), table.dtype),
            pltpu.SemaphoreType.DMA((2,)),
        ],
    )
    out_shape = (
        jax.ShapeDtypeStruct((b_pad, D), table.dtype),
        jax.ShapeDtypeStruct((b_pad * (n_ents - 1), D), table.dtype),
    )
    return pl.pallas_call(
        kernel,
        out_shape=out_shape,
        grid_spec=grid_spec,
        compiler_params=pltpu.CompilerParams(
            dimension_semantics=("arbitrary",),  # cross-step DMA prefetch => sequential
            vmem_limit_bytes=vmem_limit,
        ),
    )(flat_idx_1d, table)


# ---------------------------------------------------------------------------
# Wrapper
# ---------------------------------------------------------------------------
def _round_up(x, m):
    return ((x + m - 1) // m) * m


def _fast_path_budget_bytes():
    # Conservative default (safe under v7x 64 MiB physical / 32 MiB scoped VMEM);
    # shrink further if the runtime reports a smaller VMEM capacity.
    budget = 12 << 20
    try:
        cap = getattr(pltpu.get_tpu_info(), "vmem_capacity_bytes", None)
        if cap:
            budget = min(budget, cap // 5)
    except Exception:
        pass
    return budget


def hyperbolic_static_embedding_forward(indices, table, *, block_batch=256,
                                        force_hbm_gather=False):
    """indices: (B, N) int32, table: (V, D) float32 -> (subject, objects)."""
    B, N = indices.shape
    V, D = table.shape
    assert N >= 2, "need at least (child, parent)"

    # Batch block: multiple of 8 (sublane alignment), amortizes the ~0.35us
    # per-grid-step overhead, and for small batches aims for >=2 grid blocks
    # so the 'parallel' axis can populate both v7x TensorCores.
    bt = _round_up(max(8, min(block_batch, _round_up(pl.cdiv(B, 2), 8))), 8)
    num_blocks = pl.cdiv(B, bt)
    b_pad = num_blocks * bt

    # Clamp (avoid OOB gathers on bad indices) and pad batch to the block grid.
    idx = jnp.clip(indices.astype(jnp.int32), 0, V - 1)
    if b_pad != B:
        idx = jnp.pad(idx, ((0, b_pad - B), (0, 0)))          # pad rows gather row 0

    # Per-block ordering: [bt subject indices | bt*(N-1) object indices] so the
    # kernel's outputs are plain leading-dim slices of the gathered block.
    blocks = idx.reshape(num_blocks, bt, N)
    blocked = jnp.concatenate(
        [blocks[:, :, 0], blocks[:, :, 1:].reshape(num_blocks, bt * (N - 1))],
        axis=1,
    )                                                          # (nb, bt*N)

    vmem_limit = 32 << 20
    itemsize = jnp.dtype(table.dtype).itemsize
    footprint = (2 * V * D * itemsize            # resident (double-buffered) table
                 + bt * N * V * 4                # one-hot
                 + 3 * bt * N * D * 4)           # gathered rows + outputs
    use_fast = (not force_hbm_gather) and footprint <= _fast_path_budget_bytes()

    if use_fast:
        flat_idx = blocked.reshape(b_pad * N, 1)               # VMEM input
        subj2d, obj2d = _forward_fast(flat_idx, table, num_blocks=num_blocks,
                                      bt=bt, n_ents=N, vmem_limit=vmem_limit)
    else:
        flat_idx = blocked.reshape(-1)                         # SMEM scalar prefetch
        subj2d, obj2d = _forward_dma(flat_idx, table, num_blocks=num_blocks,
                                     bt=bt, n_ents=N, vmem_limit=vmem_limit)

    objects = obj2d.reshape(b_pad, N - 1, D)[:B]
    subject = jnp.broadcast_to(subj2d[:B][:, None, :], objects.shape)
    return subject, objects


def _reference_forward(indices, table):
    """Pure-JAX reference of the PyTorch forward (for validation)."""
    emb = table[indices]                                               # (B, N, D)
    norm = jnp.sqrt(jnp.sum(emb * emb, axis=-1, keepdims=True))
    scale = jnp.where(norm > MAX_NORM, MAX_NORM / (norm + RENORM_EPS), 1.0)
    emb = emb * scale
    objects = emb[:, 1:, :]
    subject = jnp.broadcast_to(emb[:, 0:1, :], objects.shape)
    return subject, objects


if __name__ == "__main__":
    key = jax.random.PRNGKey(0)
    k_tab, k_idx, k_idx2 = jax.random.split(key, 3)

    vocab_size = 64       # len(entity_ids)
    embed_dim = 32
    num_entities = 8      # (child, parent, 6 negative parents)

    # nn.Embedding weight init: uniform_(-0.001, 0.001); blow up every 3rd row
    # so the max_norm renormalization path is exercised.
    table = jax.random.uniform(
        k_tab, (vocab_size, embed_dim), dtype=jnp.float32,
        minval=-0.001, maxval=0.001,
    )
    table = table.at[::3, :].multiply(5000.0)

    # ---- fast path (table resident in VMEM, one-hot MXU gather) ----
    batch = 6
    indices = jax.random.randint(
        k_idx, (batch, num_entities), 0, vocab_size, dtype=jnp.int32)
    subject, objects = jax.block_until_ready(
        hyperbolic_static_embedding_forward(indices, table))
    ref_subject, ref_objects = _reference_forward(indices, table)
    assert subject.shape == (batch, num_entities - 1, embed_dim)
    assert objects.shape == (batch, num_entities - 1, embed_dim)
    assert jnp.allclose(objects, ref_objects, atol=1e-5, rtol=1e-5)
    assert jnp.allclose(subject, ref_subject, atol=1e-5, rtol=1e-5)

    # ---- fallback path (HBM row gather, double-buffered DMA, multi-block) ----
    batch2 = 20
    indices2 = jax.random.randint(
        k_idx2, (batch2, num_entities), 0, vocab_size, dtype=jnp.int32)
    subject2, objects2 = jax.block_until_ready(
        hyperbolic_static_embedding_forward(indices2, table,
                                            block_batch=8, force_hbm_gather=True))
    ref_subject2, ref_objects2 = _reference_forward(indices2, table)
    assert subject2.shape == (batch2, num_entities - 1, embed_dim)
    assert objects2.shape == (batch2, num_entities - 1, embed_dim)
    assert jnp.allclose(objects2, ref_objects2, atol=1e-5, rtol=1e-5)
    assert jnp.allclose(subject2, ref_subject2, atol=1e-5, rtol=1e-5)

    print("KERNEL_OK")
</pallas_src>

<mosaic_0001>
module attributes {stable_mosaic.version = 11 : i64} {
  func.func @_onehot_gather_kernel(%arg0: i32, %arg1: memref<64x1xi32, #tpu.memory_space<vmem>>, %arg2: memref<64x32xf32, #tpu.memory_space<vmem>>, %arg3: memref<8x32xf32, #tpu.memory_space<vmem>>, %arg4: memref<56x32xf32, #tpu.memory_space<vmem>>) attributes {dimension_semantics = [#tpu.dimension_semantics<parallel>], iteration_bounds = array<i64: 1>, scalar_prefetch = 0 : i64, scratch_operands = 0 : i64, tpu.core_type = #tpu.core_type<tc>, window_params = [{transform_indices = @transform_0, window_bounds = array<i64: 64, 1>}, {pipeline_mode = #tpu.pipeline_mode<synchronous>, transform_indices = @transform_1, window_bounds = array<i64: 64, 32>}, {transform_indices = @transform_2, window_bounds = array<i64: 8, 32>}, {transform_indices = @transform_3, window_bounds = array<i64: 56, 32>}]} {
    %c0 = arith.constant 0 : index
    %c0_0 = arith.constant 0 : index
    %0 = vector.load %arg1[%c0, %c0_0] : memref<64x1xi32, #tpu.memory_space<vmem>>, vector<64x1xi32>
    %1 = tpu.iota {dimensions = array<i32: 1>} : vector<64x64xi32>
    %2 = vector.broadcast %0 : vector<64x1xi32> to vector<64x64xi32>
    %3 = arith.cmpi eq, %1, %2 : vector<64x64xi32>
    %4 = arith.extui %3 : vector<64x64xi1> to vector<64x64xi32>
    %5 = arith.sitofp %4 : vector<64x64xi32> to vector<64x64xf32>
    %c0_1 = arith.constant 0 : index
    %c0_2 = arith.constant 0 : index
    %6 = vector.load %arg2[%c0_1, %c0_2] : memref<64x32xf32, #tpu.memory_space<vmem>>, vector<64x32xf32>
    %cst = arith.constant dense<0.000000e+00> : vector<64x32xf32>
    %7 = tpu.matmul %5, %6, %cst {dimension_numbers = #tpu.dot_dimension_numbers<[1], [0], [0], [1], [0, 0, 1, 1], [], []>} : vector<64x64xf32>, vector<64x32xf32>, vector<64x32xf32> -> vector<64x32xf32>
    %8 = arith.mulf %7, %7 : vector<64x32xf32>
    %cst_3 = arith.constant dense<0.000000e+00> : vector<64xf32>
    %9 = vector.multi_reduction <add>, %8, %cst_3 [1] : vector<64x32xf32> to vector<64xf32>
    %10 = vector.shape_cast %9 : vector<64xf32> to vector<64x1xf32>
    %cst_4 = arith.constant 1.000000e+00 : f32
    %11 = vector.broadcast %cst_4 : f32 to vector<64x1xf32>
    %12 = arith.cmpf ogt, %10, %11 : vector<64x1xf32>
    %13 = math.rsqrt %10 : vector<64x1xf32>
    %cst_5 = arith.constant 1.000000e+00 : f32
    %14 = vector.broadcast %cst_5 : f32 to vector<64x1xf32>
    %15 = arith.mulf %14, %13 : vector<64x1xf32>
    %cst_6 = arith.constant 1.000000e+00 : f32
    %16 = vector.broadcast %cst_6 : f32 to vector<64x1xf32>
    %17 = arith.select %12, %15, %16 : vector<64x1xi1>, vector<64x1xf32>
    %18 = vector.broadcast %17 : vector<64x1xf32> to vector<64x32xf32>
    %19 = arith.mulf %7, %18 : vector<64x32xf32>
    %20 = vector.extract_strided_slice %19 {offsets = [0, 0], sizes = [8, 32], strides = [1, 1]} : vector<64x32xf32> to vector<8x32xf32>
    %c0_7 = arith.constant 0 : index
    %c0_8 = arith.constant 0 : index
    %21 = vector.load %arg3[%c0_7, %c0_8] : memref<8x32xf32, #tpu.memory_space<vmem>>, vector<8x32xf32>
    tpu.vector_store %arg3[%c0_7, %c0_8], %20 {strides = array<i32>} : memref<8x32xf32, #tpu.memory_space<vmem>>, vector<8x32xf32>,
    %22 = vector.extract_strided_slice %19 {offsets = [8, 0], sizes = [56, 32], strides = [1, 1]} : vector<64x32xf32> to vector<56x32xf32>
    %c0_9 = arith.constant 0 : index
    %c0_10 = arith.constant 0 : index
    %23 = vector.load %arg4[%c0_9, %c0_10] : memref<56x32xf32, #tpu.memory_space<vmem>>, vector<56x32xf32>
    tpu.vector_store %arg4[%c0_9, %c0_10], %22 {strides = array<i32>} : memref<56x32xf32, #tpu.memory_space<vmem>>, vector<56x32xf32>,
    return
  }
  func.func @transform_0(%arg0: i32) -> (i32, i32) {
    %c0_i32 = arith.constant 0 : i32
    %c0_i32_0 = arith.constant 0 : i32
    return %arg0, %c0_i32 : i32, i32
  }
  func.func @transform_1(%arg0: i32) -> (i32, i32) {
    %c0_i32 = arith.constant 0 : i32
    %c0_i32_0 = arith.constant 0 : i32
    %c0_i32_1 = arith.constant 0 : i32
    return %c0_i32, %c0_i32_0 : i32, i32
  }
  func.func @transform_2(%arg0: i32) -> (i32, i32) {
    %c0_i32 = arith.constant 0 : i32
    %c0_i32_0 = arith.constant 0 : i32
    return %arg0, %c0_i32 : i32, i32
  }
  func.func @transform_3(%arg0: i32) -> (i32, i32) {
    %c0_i32 = arith.constant 0 : i32
    %c0_i32_0 = arith.constant 0 : i32
    return %arg0, %c0_i32 : i32, i32
  }
}

</mosaic_0001>

<llo_original>
// kernel: tpu_custom_call.1
$region0: #{tpu_custom_call.1}
  #allocation0 [shape = 'u32[]', space=smem, size = 0x4, offset = 0x4, fixed_abs, tag = 'smem constant byte address 0x4 - core index']
  #allocation1 [shape = 'u32[144,128]{1,0:T(1,128)}', space=vmem, size = 0x12000, scoped, tag = 'internal scratch']
  %s0 = inlined_call_operand.vmem [shape: s32[64,1], index: 0, kind: input, shape index: {}]
  %s1 = inlined_call_operand.vmem [shape: f32[64,32], index: 1, kind: input, shape index: {}]
  %s2 = inlined_call_operand.hbm [shape: f32[8,32], index: 2, kind: output, shape index: {0}]
  %s3 = inlined_call_operand.vmem [shape: f32[56,32], index: 3, kind: output, shape index: {1}]
  %4 = xla_tuple %s2, %s3
  %s5 = sld [smem:[#allocation0]]
  $region26: #{tpu_custom_call.1} parent=0
    _
  %s7 = ssub.s32 1, %s5
  %s8 = scalar_select 0, %s7, %s5
  $region1: #{tpu_custom_call.1} parent=0
    #allocation2 [shape = 'u8[4096]{0}', space=vmem, size = 0x1000, scoped, tag = 'output window, operand 0, single buffered']
    #allocation3 [shape = 's32[1]{0}', space=sflag, size = 0x4, scoped, tag = 'scoped memory for tpu_custom_call.1']
    %9 = vsyncpa [#allocation3], 0
    // Predicated region
    $region2: #{tpu_custom_call.1} parent=1 // pred_check
      _
    $region3: #{tpu_custom_call.1} parent=1 // pred_check_branch
      %11 = sbr.rel (0) target = $region5
    $region4: #{tpu_custom_call.1} parent=1 // pred_region
      _
    $region5: #{tpu_custom_call.1} parent=1 // pred_fallthru
      _
    // Predicated region
    $region6: #{tpu_custom_call.1} parent=1 // pred_check
      _
    $region7: #{tpu_custom_call.1} parent=1 // pred_check_branch
      %13 = sbr.rel (0) target = $region9
    $region8: #{tpu_custom_call.1} parent=1 // pred_region
      _
    $region9: #{tpu_custom_call.1} parent=1 // pred_fallthru
      _
    %v14 = vld [vmem:[%s0] sm:$0xff]
    %v15 = vld [vmem:[%s0 + $0x8] sm:$0xff]
    %v16 = vld [vmem:[%s0 + $0x10] sm:$0xff]
    %v17 = vld [vmem:[%s0 + $0x18] sm:$0xff]
    %v18 = vld [vmem:[%s0 + $0x20] sm:$0xff]
    %v19 = vld [vmem:[%s0 + $0x28] sm:$0xff]
    %v20 = vld [vmem:[%s0 + $0x30] sm:$0xff]
    %v21 = vld [vmem:[%s0 + $0x38] sm:$0xff]
    %v22 = vlaneseq
    %v23 = vand.u32 %v22, 127
    %24 = vset.pattern.permute.xlu0 0
    %25 = vperm.xlu0 %24, %v14
    %v26 = vpop.permute.xlu0 %25
    %27 = vset.pattern.permute.xlu0 0
    %28 = vperm.xlu0 %27, %v15
    %v29 = vpop.permute.xlu0 %28
    %30 = vset.pattern.permute.xlu0 0
    %31 = vperm.xlu0 %30, %v16
    %v32 = vpop.permute.xlu0 %31
    %33 = vset.pattern.permute.xlu0 0
    %34 = vperm.xlu0 %33, %v17
    %v35 = vpop.permute.xlu0 %34
    %36 = vset.pattern.permute.xlu0 0
    %37 = vperm.xlu0 %36, %v18
    %v38 = vpop.permute.xlu0 %37
    %39 = vset.pattern.permute.xlu0 0
    %40 = vperm.xlu0 %39, %v19
    %v41 = vpop.permute.xlu0 %40
    %42 = vset.pattern.permute.xlu0 0
    %43 = vperm.xlu0 %42, %v20
    %v44 = vpop.permute.xlu0 %43
    %45 = vset.pattern.permute.xlu0 0
    %46 = vperm.xlu0 %45, %v21
    %v47 = vpop.permute.xlu0 %46
    %vm48 = vcmp.eq.s32.totalorder %v23, %v26
    %vm49 = vcmp.eq.s32.totalorder %v23, %v29
    %vm50 = vcmp.eq.s32.totalorder %v23, %v32
    %vm51 = vcmp.eq.s32.totalorder %v23, %v35
    %vm52 = vcmp.eq.s32.totalorder %v23, %v38
    %vm53 = vcmp.eq.s32.totalorder %v23, %v41
    %vm54 = vcmp.eq.s32.totalorder %v23, %v44
    %vm55 = vcmp.eq.s32.totalorder %v23, %v47
    %v56 = vsel %vm48, 1, 0
    %v57 = vsel %vm49, 1, 0
    %v58 = vsel %vm50, 1, 0
    %v59 = vsel %vm51, 1, 0
    %v60 = vsel %vm52, 1, 0
    %v61 = vsel %vm53, 1, 0
    %v62 = vsel %vm54, 1, 0
    %v63 = vsel %vm55, 1, 0
    %v64 = vcvt.s32.f32 %v56
    %v65 = vcvt.s32.f32 %v57
    %v66 = vcvt.s32.f32 %v58
    %v67 = vcvt.s32.f32 %v59
    %v68 = vcvt.s32.f32 %v60
    %v69 = vcvt.s32.f32 %v61
    %v70 = vcvt.s32.f32 %v62
    %v71 = vcvt.s32.f32 %v63
    %v72 = vld [vmem:[%s1] sm:$0xff]
    %v73 = vld [vmem:[%s1 + $0x8] sm:$0xff]
    %v74 = vld [vmem:[%s1 + $0x10] sm:$0xff]
    %v75 = vld [vmem:[%s1 + $0x18] sm:$0xff]
    %v76 = vld [vmem:[%s1 + $0x20] sm:$0xff]
    %v77 = vld [vmem:[%s1 + $0x28] sm:$0xff]
    %v78 = vld [vmem:[%s1 + $0x30] sm:$0xff]
    %v79 = vld [vmem:[%s1 + $0x38] sm:$0xff]
    %vm80 = vcmask 523264
    %v82 = vsel %vm80, %v64, 0
    %v85 = vsel %vm80, %v65, 0
    %v88 = vsel %vm80, %v66, 0
    %v91 = vsel %vm80, %v67, 0
    %v94 = vsel %vm80, %v68, 0
    %v97 = vsel %vm80, %v69, 0
    %v100 = vsel %vm80, %v70, 0
    %v103 = vsel %vm80, %v71, 0
    %105 = vmatprep.subr.mxu0 0.0
    %106 = vmatpush1.msra.mxu0 0.0
    %107 = vmatprep.subr.mxu0 0.0
    %108 = vmatpush1.msra.mxu0 0.0
    %109 = vmatprep.subr.mxu0 0.0
    %110 = vmatpush1.msra.mxu0 0.0
    %111 = vmatprep.subr.mxu0 0.0
    %112 = vmatpush1.msra.mxu0 0.0
    %113 = vmatprep.subr.mxu0 0.0
    %114 = vmatpush1.msra.mxu0 0.0
    %115 = vmatprep.subr.mxu0 0.0
    %116 = vmatpush1.msra.mxu0 0.0
    %117 = vmatprep.subr.mxu0 0.0
    %118 = vmatpush1.msra.mxu0 0.0
    %119 = vmatprep.subr.mxu0 0.0
    %120 = vmatpush1.msra.mxu0 0.0
    %121 = vmatprep.subr.mxu0 0.0
    %122 = vmatpush1.msra.mxu0 %v79
    %123 = vmatprep.subr.mxu0 0.0
    %124 = vmatpush1.msra.mxu0 %v78
    %125 = vmatprep.subr.mxu0 0.0
    %126 = vmatpush1.msra.mxu0 %v77
    %127 = vmatprep.subr.mxu0 0.0
    %128 = vmatpush1.msra.mxu0 %v76
    %129 = vmatprep.subr.mxu0 0.0
    %130 = vmatpush1.msra.mxu0 %v75
    %131 = vmatprep.subr.mxu0 0.0
    %132 = vmatpush1.msra.mxu0 %v74
    %133 = vmatprep.subr.mxu0 0.0
    %134 = vmatpush1.msra.mxu0 %v73
    %135 = vmatprep.subr.mxu0 0.0
    %136 = vmatpush1.msra.mxu0 %v72
    %137 = vmatprep.subr.mxu0 0.0
    %138 = vmatpush2.msra.mxu0 0.0
    %139 = vmatprep.subr.mxu0 0.0
    %140 = vmatpush2.msra.mxu0 0.0
    %141 = vmatprep.subr.mxu0 0.0
    %142 = vmatpush2.msra.mxu0 0.0
    %143 = vmatprep.subr.mxu0 0.0
    %144 = vmatpush2.msra.mxu0 0.0
    %145 = vmatprep.subr.mxu0 0.0
    %146 = vmatpush2.msra.mxu0 0.0
    %147 = vmatprep.subr.mxu0 0.0
    %148 = vmatpush2.msra.mxu0 0.0
    %149 = vmatprep.subr.mxu0 0.0
    %150 = vmatpush2.msra.mxu0 0.0
    %151 = vmatprep.subr.mxu0 0.0
    %152 = vmatpush2.msra.mxu0 0.0
    %153 = vmatprep.subr.mxu0 0.0
    %154 = vmatpush2.msra.mxu0 0.0
    %155 = vmatprep.subr.mxu0 0.0
    %156 = vmatpush2.msra.mxu0 0.0
    %157 = vmatprep.subr.mxu0 0.0
    %158 = vmatpush2.msra.mxu0 0.0
    %159 = vmatprep.subr.mxu0 0.0
    %160 = vmatpush2.msra.mxu0 0.0
    %161 = vmatprep.subr.mxu0 0.0
    %162 = vmatpush2.msra.mxu0 0.0
    %163 = vmatprep.subr.mxu0 0.0
    %164 = vmatpush2.msra.mxu0 0.0
    %165 = vmatprep.subr.mxu0 0.0
    %166 = vmatpush2.msra.mxu0 0.0
    %167 = vmatprep.subr.mxu0 0.0
    %168 = vmatpush2.msra.mxu0 0.0
    %169 = vmatprep.mubr.f32.mxu0 0.0
    %170 = vmatmul.mubr.f32.gmra.mxu0 %v82
    %v171 = vpop.f32.mrf.mxu0
    %v172 = vadd.f32 0.0, %v171
    %v173 = vpop.f32.mrf.mxu0
    %174 = vmatprep.mubr.f32.mxu0 0.0
    %175 = vmatmul.mubr.f32.gmra.mxu0 %v85
    %v176 = vpop.f32.mrf.mxu0
    %v177 = vadd.f32 0.0, %v176
    %v178 = vpop.f32.mrf.mxu0
    %179 = vmatprep.mubr.f32.mxu0 0.0
    %180 = vmatmul.mubr.f32.gmra.mxu0 %v88
    %v181 = vpop.f32.mrf.mxu0
    %v182 = vadd.f32 0.0, %v181
    %v183 = vpop.f32.mrf.mxu0
    %184 = vmatprep.mubr.f32.mxu0 0.0
    %185 = vmatmul.mubr.f32.gmra.mxu0 %v91
    %v186 = vpop.f32.mrf.mxu0
    %v187 = vadd.f32 0.0, %v186
    %v188 = vpop.f32.mrf.mxu0
    %189 = vmatprep.mubr.f32.mxu0 0.0
    %190 = vmatmul.mubr.f32.gmra.mxu0 %v94
    %v191 = vpop.f32.mrf.mxu0
    %v192 = vadd.f32 0.0, %v191
    %v193 = vpop.f32.mrf.mxu0
    %194 = vmatprep.mubr.f32.mxu0 0.0
    %195 = vmatmul.mubr.f32.gmra.mxu0 %v97
    %v196 = vpop.f32.mrf.mxu0
    %v197 = vadd.f32 0.0, %v196
    %v198 = vpop.f32.mrf.mxu0
    %199 = vmatprep.mubr.f32.mxu0 0.0
    %200 = vmatmul.mubr.f32.gmra.mxu0 %v100
    %v201 = vpop.f32.mrf.mxu0
    %v202 = vadd.f32 0.0, %v201
    %v203 = vpop.f32.mrf.mxu0
    %204 = vmatprep.mubr.f32.mxu0 0.0
    %205 = vmatmul.mubr.f32.gmra.mxu0 %v103
    %v206 = vpop.f32.mrf.mxu0
    %v207 = vadd.f32 0.0, %v206
    %v208 = vpop.f32.mrf.mxu0
    %209 = vdwg.mxu0
    %v210 = vmul.f32 %v172, %v172
    %v211 = vmul.f32 %v177, %v177
    %v212 = vmul.f32 %v182, %v182
    %v213 = vmul.f32 %v187, %v187
    %v214 = vmul.f32 %v192, %v192
    %v215 = vmul.f32 %v197, %v197
    %v216 = vmul.f32 %v202, %v202
    %v217 = vmul.f32 %v207, %v207
    %vm218 = vcmask 261120
    %v219 = vsel %vm218, %v210, 0.0
    %220 = vadd.xlane.f32.xlu0 %v219
    %v221 = vpop.xlane.xlu0 %220
    %v222 = vsel %vm218, %v211, 0.0
    %223 = vadd.xlane.f32.xlu0 %v222
    %v224 = vpop.xlane.xlu0 %223
    %v225 = vsel %vm218, %v212, 0.0
    %226 = vadd.xlane.f32.xlu0 %v225
    %v227 = vpop.xlane.xlu0 %226
    %v228 = vsel %vm218, %v213, 0.0
    %229 = vadd.xlane.f32.xlu0 %v228
    %v230 = vpop.xlane.xlu0 %229
    %v231 = vsel %vm218, %v214, 0.0
    %232 = vadd.xlane.f32.xlu0 %v231
    %v233 = vpop.xlane.xlu0 %232
    %v234 = vsel %vm218, %v215, 0.0
    %235 = vadd.xlane.f32.xlu0 %v234
    %v236 = vpop.xlane.xlu0 %235
    %v237 = vsel %vm218, %v216, 0.0
    %238 = vadd.xlane.f32.xlu0 %v237
    %v239 = vpop.xlane.xlu0 %238
    %v240 = vsel %vm218, %v217, 0.0
    %241 = vadd.xlane.f32.xlu0 %v240
    %v242 = vpop.xlane.xlu0 %241
    %vm243 = vcmp.gt.f32.partialorder %v221, 1.0
    %vm244 = vcmp.gt.f32.partialorder %v224, 1.0
    %vm245 = vcmp.gt.f32.partialorder %v227, 1.0
    %vm246 = vcmp.gt.f32.partialorder %v230, 1.0
    %vm247 = vcmp.gt.f32.partialorder %v233, 1.0
    %vm248 = vcmp.gt.f32.partialorder %v236, 1.0
    %vm249 = vcmp.gt.f32.partialorder %v239, 1.0
    %vm250 = vcmp.gt.f32.partialorder %v242, 1.0
    %v251 = vrsqrt.pop %v221
    %v252 = vrsqrt.pop %v224
    %v253 = vrsqrt.pop %v227
    %v254 = vrsqrt.pop %v230
    %v255 = vrsqrt.pop %v233
    %v256 = vrsqrt.pop %v236
    %v257 = vrsqrt.pop %v239
    %v258 = vrsqrt.pop %v242
    %v259 = vsel %vm243, %v251, 1.0
    %v260 = vsel %vm244, %v252, 1.0
    %v261 = vsel %vm245, %v253, 1.0
    %v262 = vsel %vm246, %v254, 1.0
    %v263 = vsel %vm247, %v255, 1.0
    %v264 = vsel %vm248, %v256, 1.0
    %v265 = vsel %vm249, %v257, 1.0
    %v266 = vsel %vm250, %v258, 1.0
    %v267 = vmul.f32 %v172, %v259
    %v268 = vmul.f32 %v177, %v260
    %v269 = vmul.f32 %v182, %v261
    %v270 = vmul.f32 %v187, %v262
    %v271 = vmul.f32 %v192, %v263
    %v272 = vmul.f32 %v197, %v264
    %v273 = vmul.f32 %v202, %v265
    %v274 = vmul.f32 %v207, %v266
    %275 = vst.msk [vmem:[#allocation2] sm:$0xff] %vm218, %v267
    %276 = vst.msk [vmem:[%s3] sm:$0xff] %vm218, %v268
    %277 = vst.msk [vmem:[%s3 + $0x8] sm:$0xff] %vm218, %v269
    %278 = vst.msk [vmem:[%s3 + $0x10] sm:$0xff] %vm218, %v270
    %279 = vst.msk [vmem:[%s3 + $0x18] sm:$0xff] %vm218, %v271
    %280 = vst.msk [vmem:[%s3 + $0x20] sm:$0xff] %vm218, %v272
    %281 = vst.msk [vmem:[%s3 + $0x28] sm:$0xff] %vm218, %v273
    %282 = vst.msk [vmem:[%s3 + $0x30] sm:$0xff] %vm218, %v274
    // Predicated region
    $region10: #{tpu_custom_call.1} parent=1 // pred_check
      _
    $region11: #{tpu_custom_call.1} parent=1 // pred_check_branch
      %284 = sbr.rel (0) target = $region13
    $region12: #{tpu_custom_call.1} parent=1 // pred_region
      %s286 = ssub.s32 128, 128
      %287 = vsyncadd [#allocation3], %s286
      %s289 = sshll.u32 [#allocation2], 4
      %s290 = int_to_ptr.vmem [resolvable:$true] %s289
      %292 = dma.vmem_to_hbm [thread:$0]  %s290, 128, %s2, [#allocation3]
    $region13: #{tpu_custom_call.1} parent=1 // pred_fallthru
      _
    // Predicated region
    $region14: #{tpu_custom_call.1} parent=1 // pred_check
      _
    $region15: #{tpu_custom_call.1} parent=1 // pred_check_branch
      %294 = sbr.rel (0) target = $region17
    $region16: #{tpu_custom_call.1} parent=1 // pred_region
      _
    $region17: #{tpu_custom_call.1} parent=1 // pred_fallthru
      _
    // Predicated region
    $region18: #{tpu_custom_call.1} parent=1 // pred_check
      _
    $region19: #{tpu_custom_call.1} parent=1 // pred_check_branch
      %296 = sbr.rel (0) target = $region21
    $region20: #{tpu_custom_call.1} parent=1 // pred_region
      %297 = dma.done [#allocation3], 128
    $region21: #{tpu_custom_call.1} parent=1 // pred_fallthru
      _
    // Predicated region
    $region22: #{tpu_custom_call.1} parent=1 // pred_check
      _
    $region23: #{tpu_custom_call.1} parent=1 // pred_check_branch
      %299 = sbr.rel (0) target = $region25
    $region24: #{tpu_custom_call.1} parent=1 // pred_region
      _
    $region25: #{tpu_custom_call.1} parent=1 // pred_fallthru
      _
    %300 = vsyncpa [#allocation3], 1

</llo_original>
